<compile_context>
chip_gen: v7x
topology: tpu7x:2x2x1
jax: 0.10.0
libtpu: 0.0.40
codegen_flags: <defaults>
</compile_context>

<pallas_src>
import functools

import jax
import jax.numpy as jnp
from jax.experimental import pallas as pl
from jax.experimental.pallas import tpu as pltpu


def _lstm_chunk_kernel(xg_ref, whh_ref, h0_ref, c0_ref, out_ref,
                       h_sc, c_sc, *, hidden_units, chunk):
    """Processes `chunk` LSTM timesteps per grid iteration.

    Gate column order (pre-permuted in the wrapper): [i, f, o | g].

    xg_ref : (chunk, B, 4H) bf16 -- x_t @ W_ih^T + (b_ih + b_hh), gate-permuted
    whh_ref: (H, 4H)        bf16 -- recurrent weight (gate-permuted, MXU operand)
    h0_ref : (B, H)         bf16 -- initial hidden state (read only at step 0)
    c0_ref : (B, H)         f32  -- initial cell state   (read only at step 0)
    out_ref: (B, chunk, H)  f32  -- batch-first output tile
    h_sc   : (B, H) bf16 scratch; persists across (sequential) grid iterations.
    c_sc   : (B, H) f32  scratch; persists across (sequential) grid iterations.
    """
    H = hidden_units

    @pl.when(pl.program_id(0) == 0)
    def _():
        h_sc[...] = h0_ref[...].astype(h_sc.dtype)
        c_sc[...] = c0_ref[...].astype(c_sc.dtype)

    h = h_sc[...]                      # (B, H) bf16
    c = c_sc[...]                      # (B, H) f32
    whh = whh_ref[...]                 # (H, 4H) bf16, loaded once per chunk

    def step(xg_bf16, h, c):
        # Only the recurrent matmul stays on the serial critical path.
        rec = jnp.dot(h, whh, preferred_element_type=jnp.float32)   # (B, 4H) f32
        gates = xg_bf16.astype(jnp.float32) + rec                   # (B, 4H) f32
        sig = jax.nn.sigmoid(gates[:, :3 * H])                      # i | f | o
        g_g = jnp.tanh(gates[:, 3 * H:])                            # cell cand.
        i_g = sig[:, 0 * H:1 * H]
        f_g = sig[:, 1 * H:2 * H]
        o_g = sig[:, 2 * H:3 * H]
        c_new = f_g * c + i_g * g_g
        h_f32 = o_g * jnp.tanh(c_new)
        return h_f32, c_new

    if chunk <= 16:
        # Fully unrolled static inner loop.
        for s in range(chunk):
            h_f32, c = step(xg_ref[s], h, c)
            out_ref[:, s, :] = h_f32.astype(out_ref.dtype)
            h = h_f32.astype(h_sc.dtype)
    else:
        # Partially-unrolled fori_loop keeps LLO visibility but caps code size
        # and vreg pressure at large chunk.
        def body(s, carry):
            h, c = carry
            h_f32, c = step(xg_ref[s], h, c)
            out_ref[:, pl.ds(s, 1), :] = h_f32[:, None, :].astype(out_ref.dtype)
            return (h_f32.astype(h_sc.dtype), c)

        h, c = jax.lax.fori_loop(0, chunk, body, (h, c), unroll=4)

    h_sc[...] = h
    c_sc[...] = c


def _pick_chunk(T, B, H, tile_budget_bytes=8 << 20):
    """Largest chunk (divisor of T) whose double-buffered tiles fit the budget.

    Budget is conservative (8 MiB) so the same choice is safe on v7x's 64 MiB
    physical / 32 MiB scoped VMEM as well as v5e/v6e.
    """
    per_step = 2 * (B * 4 * H * 2) + 2 * (B * H * 4)   # bf16 in + f32 out, x2 buffers
    max_chunk = max(1, tile_budget_bytes // max(per_step, 1))
    if T <= max_chunk:
        return T                                        # whole sequence, grid=(1,)
    # Multiple-of-8 divisors keep the (8,128) constraint on the (B, chunk, H) out tile.
    candidates = [d for d in range(8, T, 8) if T % d == 0 and d <= max_chunk]
    if candidates:
        return max(candidates)
    return T  # TODO(synk): guard tail timesteps if T has no suitable divisor at huge T*B*H.


def question_lstm_forward(x_ids, hidden1, hidden2,
                          embed_weights, w_ih, w_hh, b_ih, b_hh, *, chunk=None):
    """Forward pass of question_lstm.

    x_ids:    (B, T) int32 token ids
    hidden1:  (1, B, H) initial hidden state
    hidden2:  (1, B, H) initial cell state
    embed_weights: (V, E) frozen embedding table
    w_ih: (4H, E), w_hh: (4H, H), b_ih/b_hh: (4H,)  -- PyTorch LSTM param shapes
    returns: (B, T, H) sequence of hidden states (batch_first=True)
    """
    # Frozen embedding lookup, gathered directly in time-major (T, B, E) order.
    x_tbe = jnp.take(embed_weights, x_ids.T, axis=0)          # (T, B, E)
    T, B, E = x_tbe.shape
    H = hidden1.shape[-1]

    # Gate-column permutation: PyTorch order [i, f, g, o] -> kernel order [i, f, o, g]
    perm = jnp.concatenate([jnp.arange(0, 2 * H),
                            jnp.arange(3 * H, 4 * H),
                            jnp.arange(2 * H, 3 * H)])

    wih_t = jnp.asarray(w_ih, jnp.float32).T[:, perm].astype(jnp.bfloat16)   # (E, 4H)
    whh_t = jnp.asarray(w_hh, jnp.float32).T[:, perm].astype(jnp.bfloat16)   # (H, 4H)
    bias = (jnp.asarray(b_ih, jnp.float32)
            + jnp.asarray(b_hh, jnp.float32))[perm]                          # (4H,) f32

    # ---- Hoisted input projection: one large matmul over all timesteps -----
    # bf16 operands on the MXU, f32 accumulation; f32 bias folded, then bf16
    # storage to halve the dominant HBM->VMEM stream.
    xg_f32 = jax.lax.dot_general(
        x_tbe.astype(jnp.bfloat16).reshape(T * B, E), wih_t,
        (((1,), (0,)), ((), ())),
        preferred_element_type=jnp.float32,
    ).reshape(T, B, 4 * H) + bias
    x_gates = xg_f32.astype(jnp.bfloat16)                                    # (T, B, 4H)

    h0 = hidden1[0].astype(jnp.bfloat16)                                     # (B, H)
    c0 = hidden2[0].astype(jnp.float32)                                      # (B, H)

    if chunk is None:
        chunk = _pick_chunk(T, B, H)
    assert T % chunk == 0, "chunk must divide T (picked automatically when chunk=None)"
    n_chunks = T // chunk

    kernel = functools.partial(_lstm_chunk_kernel, hidden_units=H, chunk=chunk)

    out_bth = pl.pallas_call(
        kernel,
        out_shape=jax.ShapeDtypeStruct((B, T, H), jnp.float32),
        grid_spec=pltpu.PrefetchScalarGridSpec(
            num_scalar_prefetch=0,
            grid=(n_chunks,),
            in_specs=[
                pl.BlockSpec((chunk, B, 4 * H), lambda t: (t, 0, 0)),  # x_gates (bf16)
                pl.BlockSpec((H, 4 * H), lambda t: (0, 0)),            # W_hh^T (bf16)
                pl.BlockSpec((B, H), lambda t: (0, 0)),                # h0
                pl.BlockSpec((B, H), lambda t: (0, 0)),                # c0
            ],
            # Batch-first output written directly by the kernel (no wrapper transpose).
            out_specs=pl.BlockSpec((B, chunk, H), lambda t: (0, t, 0)),
            scratch_shapes=[
                pltpu.VMEM((B, H), jnp.bfloat16),   # h state (persists over grid)
                pltpu.VMEM((B, H), jnp.float32),    # c state (persists over grid)
            ],
        ),
        compiler_params=pltpu.CompilerParams(
            dimension_semantics=("arbitrary",),     # time axis is sequential
            vmem_limit_bytes=32 << 20,              # explicit; safe on v5e/v6e/v7x
        ),
    )(x_gates, whh_t, h0, c0)

    return out_bth                                  # (B, T, H) batch_first


def _reference_forward(x_ids, hidden1, hidden2,
                       embed_weights, w_ih, w_hh, b_ih, b_hh):
    """Pure-JAX f32 reference (mirrors torch.nn.LSTM batch_first semantics)."""
    x_emb = jnp.take(embed_weights, x_ids, axis=0)  # (B, T, E)
    H = hidden1.shape[-1]
    h0 = hidden1[0]
    c0 = hidden2[0]

    def step(carry, x_t):
        h, c = carry
        gates = x_t @ w_ih.T + h @ w_hh.T + b_ih + b_hh
        i_g = jax.nn.sigmoid(gates[:, 0 * H:1 * H])
        f_g = jax.nn.sigmoid(gates[:, 1 * H:2 * H])
        g_g = jnp.tanh(gates[:, 2 * H:3 * H])
        o_g = jax.nn.sigmoid(gates[:, 3 * H:4 * H])
        c_new = f_g * c + i_g * g_g
        h_new = o_g * jnp.tanh(c_new)
        return (h_new, c_new), h_new

    xs = jnp.transpose(x_emb, (1, 0, 2))            # (T, B, E)
    _, outs = jax.lax.scan(step, (h0, c0), xs)
    return jnp.transpose(outs, (1, 0, 2))           # (B, T, H)


if __name__ == "__main__":
    # Small, deterministic config.
    B, T = 2, 8            # batch, sequence length
    V, E = 16, 32          # vocab size, embed_size
    H = 32                 # hidden_units

    key = jax.random.PRNGKey(0)
    k_emb, k_wih, k_whh, k_bih, k_bhh, k_ids = jax.random.split(key, 6)

    # Deterministic "pretrained" weights / LSTM parameters.
    embed_weights = jax.random.normal(k_emb, (V, E), jnp.float32) * 0.1
    w_ih = jax.random.normal(k_wih, (4 * H, E), jnp.float32) * 0.1
    w_hh = jax.random.normal(k_whh, (4 * H, H), jnp.float32) * 0.1
    b_ih = jax.random.normal(k_bih, (4 * H,), jnp.float32) * 0.1
    b_hh = jax.random.normal(k_bhh, (4 * H,), jnp.float32) * 0.1

    # Inputs: token ids + init_hidden() zeros.
    x_ids = jax.random.randint(k_ids, (B, T), 0, V, jnp.int32)
    hidden1 = jnp.zeros((1, B, H), jnp.float32)
    hidden2 = jnp.zeros((1, B, H), jnp.float32)

    fwd = jax.jit(question_lstm_forward)
    out = fwd(x_ids, hidden1, hidden2,
              embed_weights, w_ih, w_hh, b_ih, b_hh)
    out = jax.block_until_ready(out)

    ref = _reference_forward(x_ids, hidden1, hidden2,
                             embed_weights, w_ih, w_hh, b_ih, b_hh)
    assert out.shape == (B, T, H)
    max_err = float(jnp.max(jnp.abs(out - ref)))
    # bf16 matmul operands + bf16 gate stream -> small, bounded deviation.
    assert max_err < 2e-2, f"mismatch vs reference, max abs err = {max_err}"

    print("KERNEL_OK")
</pallas_src>

<mosaic_0001>
module attributes {stable_mosaic.version = 11 : i64} {
  func.func @_lstm_chunk_kernel(%arg0: i32, %arg1: memref<8x2x128xbf16, #tpu.memory_space<vmem>>, %arg2: memref<32x128xbf16, #tpu.memory_space<vmem>>, %arg3: memref<2x32xbf16, #tpu.memory_space<vmem>>, %arg4: memref<2x32xf32, #tpu.memory_space<vmem>>, %arg5: memref<2x8x32xf32, #tpu.memory_space<vmem>>, %arg6: memref<2x32xbf16, #tpu.memory_space<vmem>>, %arg7: memref<2x32xf32, #tpu.memory_space<vmem>>) attributes {dimension_semantics = [#tpu.dimension_semantics<arbitrary>], iteration_bounds = array<i64: 1>, scalar_prefetch = 0 : i64, scratch_operands = 2 : i64, tpu.core_type = #tpu.core_type<tc>, window_params = [{transform_indices = @transform_0, window_bounds = array<i64: 8, 2, 128>}, {pipeline_mode = #tpu.pipeline_mode<synchronous>, transform_indices = @transform_1, window_bounds = array<i64: 32, 128>}, {pipeline_mode = #tpu.pipeline_mode<synchronous>, transform_indices = @transform_2, window_bounds = array<i64: 2, 32>}, {pipeline_mode = #tpu.pipeline_mode<synchronous>, transform_indices = @transform_3, window_bounds = array<i64: 2, 32>}, {transform_indices = @transform_4, window_bounds = array<i64: 2, 8, 32>}]} {
    %c0_i32 = arith.constant 0 : i32
    %0 = arith.cmpi eq, %arg0, %c0_i32 : i32
    %1 = arith.extui %0 : i1 to i32
    %c0_i32_0 = arith.constant 0 : i32
    %2 = arith.cmpi ne, %1, %c0_i32_0 : i32
    scf.if %2 {
      %c0_66 = arith.constant 0 : index
      %c0_67 = arith.constant 0 : index
      %208 = vector.load %arg3[%c0_66, %c0_67] : memref<2x32xbf16, #tpu.memory_space<vmem>>, vector<2x32xbf16>
      %c0_68 = arith.constant 0 : index
      %c0_69 = arith.constant 0 : index
      %209 = vector.load %arg6[%c0_68, %c0_69] : memref<2x32xbf16, #tpu.memory_space<vmem>>, vector<2x32xbf16>
      tpu.vector_store %arg6[%c0_68, %c0_69], %208 {strides = array<i32>} : memref<2x32xbf16, #tpu.memory_space<vmem>>, vector<2x32xbf16>,
      %c0_70 = arith.constant 0 : index
      %c0_71 = arith.constant 0 : index
      %210 = vector.load %arg4[%c0_70, %c0_71] : memref<2x32xf32, #tpu.memory_space<vmem>>, vector<2x32xf32>
      %c0_72 = arith.constant 0 : index
      %c0_73 = arith.constant 0 : index
      %211 = vector.load %arg7[%c0_72, %c0_73] : memref<2x32xf32, #tpu.memory_space<vmem>>, vector<2x32xf32>
      tpu.vector_store %arg7[%c0_72, %c0_73], %210 {strides = array<i32>} : memref<2x32xf32, #tpu.memory_space<vmem>>, vector<2x32xf32>,
    } else {
    }
    %c0 = arith.constant 0 : index
    %c0_1 = arith.constant 0 : index
    %3 = vector.load %arg6[%c0, %c0_1] : memref<2x32xbf16, #tpu.memory_space<vmem>>, vector<2x32xbf16>
    %c0_2 = arith.constant 0 : index
    %c0_3 = arith.constant 0 : index
    %4 = vector.load %arg7[%c0_2, %c0_3] : memref<2x32xf32, #tpu.memory_space<vmem>>, vector<2x32xf32>
    %c0_4 = arith.constant 0 : index
    %c0_5 = arith.constant 0 : index
    %5 = vector.load %arg2[%c0_4, %c0_5] : memref<32x128xbf16, #tpu.memory_space<vmem>>, vector<32x128xbf16>
    %c0_6 = arith.constant 0 : index
    %c0_7 = arith.constant 0 : index
    %c0_8 = arith.constant 0 : index
    %6 = vector.load %arg1[%c0_6, %c0_7, %c0_8] : memref<8x2x128xbf16, #tpu.memory_space<vmem>>, vector<1x2x128xbf16>
    %7 = vector.shape_cast %6 : vector<1x2x128xbf16> to vector<2x128xbf16>
    %cst = arith.constant dense<0.000000e+00> : vector<2x128xf32>
    %8 = tpu.matmul %3, %5, %cst {dimension_numbers = #tpu.dot_dimension_numbers<[1], [0], [0], [1], [0, 0, 1, 1], [], []>} : vector<2x32xbf16>, vector<32x128xbf16>, vector<2x128xf32> -> vector<2x128xf32>
    %9 = arith.extf %7 : vector<2x128xbf16> to vector<2x128xf32>
    %10 = arith.addf %9, %8 : vector<2x128xf32>
    %11 = vector.extract_strided_slice %10 {offsets = [0, 0], sizes = [2, 96], strides = [1, 1]} : vector<2x128xf32> to vector<2x96xf32>
    %12 = arith.negf %11 : vector<2x96xf32>
    %13 = math.exp %12 : vector<2x96xf32>
    %cst_9 = arith.constant 1.000000e+00 : f32
    %14 = vector.broadcast %cst_9 : f32 to vector<2x96xf32>
    %15 = arith.addf %14, %13 : vector<2x96xf32>
    %16 = arith.divf %14, %15 : vector<2x96xf32>
    %17 = vector.extract_strided_slice %10 {offsets = [0, 96], sizes = [2, 32], strides = [1, 1]} : vector<2x128xf32> to vector<2x32xf32>
    %18 = math.tanh %17 : vector<2x32xf32>
    %19 = vector.extract_strided_slice %16 {offsets = [0, 0], sizes = [2, 32], strides = [1, 1]} : vector<2x96xf32> to vector<2x32xf32>
    %20 = vector.extract_strided_slice %16 {offsets = [0, 32], sizes = [2, 32], strides = [1, 1]} : vector<2x96xf32> to vector<2x32xf32>
    %21 = vector.extract_strided_slice %16 {offsets = [0, 64], sizes = [2, 32], strides = [1, 1]} : vector<2x96xf32> to vector<2x32xf32>
    %22 = arith.mulf %20, %4 : vector<2x32xf32>
    %23 = arith.mulf %19, %18 : vector<2x32xf32>
    %24 = arith.addf %22, %23 : vector<2x32xf32>
    %25 = math.tanh %24 : vector<2x32xf32>
    %26 = arith.mulf %21, %25 : vector<2x32xf32>
    %c0_10 = arith.constant 0 : index
    %c0_11 = arith.constant 0 : index
    %c0_12 = arith.constant 0 : index
    %27 = vector.load %arg5[%c0_10, %c0_11, %c0_12] : memref<2x8x32xf32, #tpu.memory_space<vmem>>, vector<2x1x32xf32>
    %28 = vector.shape_cast %27 : vector<2x1x32xf32> to vector<2x32xf32>
    %29 = vector.shape_cast %26 : vector<2x32xf32> to vector<2x1x32xf32>
    tpu.vector_store %arg5[%c0_10, %c0_11, %c0_12], %29 {strides = array<i32>} : memref<2x8x32xf32, #tpu.memory_space<vmem>>, vector<2x1x32xf32>,
    %30 = arith.truncf %26 : vector<2x32xf32> to vector<2x32xbf16>
    %c1 = arith.constant 1 : index
    %c0_13 = arith.constant 0 : index
    %c0_14 = arith.constant 0 : index
    %31 = vector.load %arg1[%c1, %c0_13, %c0_14] : memref<8x2x128xbf16, #tpu.memory_space<vmem>>, vector<1x2x128xbf16>
    %32 = vector.shape_cast %31 : vector<1x2x128xbf16> to vector<2x128xbf16>
    %cst_15 = arith.constant dense<0.000000e+00> : vector<2x128xf32>
    %33 = tpu.matmul %30, %5, %cst_15 {dimension_numbers = #tpu.dot_dimension_numbers<[1], [0], [0], [1], [0, 0, 1, 1], [], []>} : vector<2x32xbf16>, vector<32x128xbf16>, vector<2x128xf32> -> vector<2x128xf32>
    %34 = arith.extf %32 : vector<2x128xbf16> to vector<2x128xf32>
    %35 = arith.addf %34, %33 : vector<2x128xf32>
    %36 = vector.extract_strided_slice %35 {offsets = [0, 0], sizes = [2, 96], strides = [1, 1]} : vector<2x128xf32> to vector<2x96xf32>
    %37 = arith.negf %36 : vector<2x96xf32>
    %38 = math.exp %37 : vector<2x96xf32>
    %cst_16 = arith.constant 1.000000e+00 : f32
    %39 = vector.broadcast %cst_16 : f32 to vector<2x96xf32>
    %40 = arith.addf %39, %38 : vector<2x96xf32>
    %41 = arith.divf %39, %40 : vector<2x96xf32>
    %42 = vector.extract_strided_slice %35 {offsets = [0, 96], sizes = [2, 32], strides = [1, 1]} : vector<2x128xf32> to vector<2x32xf32>
    %43 = math.tanh %42 : vector<2x32xf32>
    %44 = vector.extract_strided_slice %41 {offsets = [0, 0], sizes = [2, 32], strides = [1, 1]} : vector<2x96xf32> to vector<2x32xf32>
    %45 = vector.extract_strided_slice %41 {offsets = [0, 32], sizes = [2, 32], strides = [1, 1]} : vector<2x96xf32> to vector<2x32xf32>
    %46 = vector.extract_strided_slice %41 {offsets = [0, 64], sizes = [2, 32], strides = [1, 1]} : vector<2x96xf32> to vector<2x32xf32>
    %47 = arith.mulf %45, %24 : vector<2x32xf32>
    %48 = arith.mulf %44, %43 : vector<2x32xf32>
    %49 = arith.addf %47, %48 : vector<2x32xf32>
    %50 = math.tanh %49 : vector<2x32xf32>
    %51 = arith.mulf %46, %50 : vector<2x32xf32>
    %c0_17 = arith.constant 0 : index
    %c1_18 = arith.constant 1 : index
    %c0_19 = arith.constant 0 : index
    %52 = vector.load %arg5[%c0_17, %c1_18, %c0_19] : memref<2x8x32xf32, #tpu.memory_space<vmem>>, vector<2x1x32xf32>
    %53 = vector.shape_cast %52 : vector<2x1x32xf32> to vector<2x32xf32>
    %54 = vector.shape_cast %51 : vector<2x32xf32> to vector<2x1x32xf32>
    tpu.vector_store %arg5[%c0_17, %c1_18, %c0_19], %54 {strides = array<i32>} : memref<2x8x32xf32, #tpu.memory_space<vmem>>, vector<2x1x32xf32>,
    %55 = arith.truncf %51 : vector<2x32xf32> to vector<2x32xbf16>
    %c2 = arith.constant 2 : index
    %c0_20 = arith.constant 0 : index
    %c0_21 = arith.constant 0 : index
    %56 = vector.load %arg1[%c2, %c0_20, %c0_21] : memref<8x2x128xbf16, #tpu.memory_space<vmem>>, vector<1x2x128xbf16>
    %57 = vector.shape_cast %56 : vector<1x2x128xbf16> to vector<2x128xbf16>
    %cst_22 = arith.constant dense<0.000000e+00> : vector<2x128xf32>
    %58 = tpu.matmul %55, %5, %cst_22 {dimension_numbers = #tpu.dot_dimension_numbers<[1], [0], [0], [1], [0, 0, 1, 1], [], []>} : vector<2x32xbf16>, vector<32x128xbf16>, vector<2x128xf32> -> vector<2x128xf32>
    %59 = arith.extf %57 : vector<2x128xbf16> to vector<2x128xf32>
    %60 = arith.addf %59, %58 : vector<2x128xf32>
    %61 = vector.extract_strided_slice %60 {offsets = [0, 0], sizes = [2, 96], strides = [1, 1]} : vector<2x128xf32> to vector<2x96xf32>
    %62 = arith.negf %61 : vector<2x96xf32>
    %63 = math.exp %62 : vector<2x96xf32>
    %cst_23 = arith.constant 1.000000e+00 : f32
    %64 = vector.broadcast %cst_23 : f32 to vector<2x96xf32>
    %65 = arith.addf %64, %63 : vector<2x96xf32>
    %66 = arith.divf %64, %65 : vector<2x96xf32>
    %67 = vector.extract_strided_slice %60 {offsets = [0, 96], sizes = [2, 32], strides = [1, 1]} : vector<2x128xf32> to vector<2x32xf32>
    %68 = math.tanh %67 : vector<2x32xf32>
    %69 = vector.extract_strided_slice %66 {offsets = [0, 0], sizes = [2, 32], strides = [1, 1]} : vector<2x96xf32> to vector<2x32xf32>
    %70 = vector.extract_strided_slice %66 {offsets = [0, 32], sizes = [2, 32], strides = [1, 1]} : vector<2x96xf32> to vector<2x32xf32>
    %71 = vector.extract_strided_slice %66 {offsets = [0, 64], sizes = [2, 32], strides = [1, 1]} : vector<2x96xf32> to vector<2x32xf32>
    %72 = arith.mulf %70, %49 : vector<2x32xf32>
    %73 = arith.mulf %69, %68 : vector<2x32xf32>
    %74 = arith.addf %72, %73 : vector<2x32xf32>
    %75 = math.tanh %74 : vector<2x32xf32>
    %76 = arith.mulf %71, %75 : vector<2x32xf32>
    %c0_24 = arith.constant 0 : index
    %c2_25 = arith.constant 2 : index
    %c0_26 = arith.constant 0 : index
    %77 = vector.load %arg5[%c0_24, %c2_25, %c0_26] : memref<2x8x32xf32, #tpu.memory_space<vmem>>, vector<2x1x32xf32>
    %78 = vector.shape_cast %77 : vector<2x1x32xf32> to vector<2x32xf32>
    %79 = vector.shape_cast %76 : vector<2x32xf32> to vector<2x1x32xf32>
    tpu.vector_store %arg5[%c0_24, %c2_25, %c0_26], %79 {strides = array<i32>} : memref<2x8x32xf32, #tpu.memory_space<vmem>>, vector<2x1x32xf32>,
    %80 = arith.truncf %76 : vector<2x32xf32> to vector<2x32xbf16>
    %c3 = arith.constant 3 : index
    %c0_27 = arith.constant 0 : index
    %c0_28 = arith.constant 0 : index
    %81 = vector.load %arg1[%c3, %c0_27, %c0_28] : memref<8x2x128xbf16, #tpu.memory_space<vmem>>, vector<1x2x128xbf16>
    %82 = vector.shape_cast %81 : vector<1x2x128xbf16> to vector<2x128xbf16>
    %cst_29 = arith.constant dense<0.000000e+00> : vector<2x128xf32>
    %83 = tpu.matmul %80, %5, %cst_29 {dimension_numbers = #tpu.dot_dimension_numbers<[1], [0], [0], [1], [0, 0, 1, 1], [], []>} : vector<2x32xbf16>, vector<32x128xbf16>, vector<2x128xf32> -> vector<2x128xf32>
    %84 = arith.extf %82 : vector<2x128xbf16> to vector<2x128xf32>
    %85 = arith.addf %84, %83 : vector<2x128xf32>
    %86 = vector.extract_strided_slice %85 {offsets = [0, 0], sizes = [2, 96], strides = [1, 1]} : vector<2x128xf32> to vector<2x96xf32>
    %87 = arith.negf %86 : vector<2x96xf32>
    %88 = math.exp %87 : vector<2x96xf32>
    %cst_30 = arith.constant 1.000000e+00 : f32
    %89 = vector.broadcast %cst_30 : f32 to vector<2x96xf32>
    %90 = arith.addf %89, %88 : vector<2x96xf32>
    %91 = arith.divf %89, %90 : vector<2x96xf32>
    %92 = vector.extract_strided_slice %85 {offsets = [0, 96], sizes = [2, 32], strides = [1, 1]} : vector<2x128xf32> to vector<2x32xf32>
    %93 = math.tanh %92 : vector<2x32xf32>
    %94 = vector.extract_strided_slice %91 {offsets = [0, 0], sizes = [2, 32], strides = [1, 1]} : vector<2x96xf32> to vector<2x32xf32>
    %95 = vector.extract_strided_slice %91 {offsets = [0, 32], sizes = [2, 32], strides = [1, 1]} : vector<2x96xf32> to vector<2x32xf32>
    %96 = vector.extract_strided_slice %91 {offsets = [0, 64], sizes = [2, 32], strides = [1, 1]} : vector<2x96xf32> to vector<2x32xf32>
    %97 = arith.mulf %95, %74 : vector<2x32xf32>
    %98 = arith.mulf %94, %93 : vector<2x32xf32>
    %99 = arith.addf %97, %98 : vector<2x32xf32>
    %100 = math.tanh %99 : vector<2x32xf32>
    %101 = arith.mulf %96, %100 : vector<2x32xf32>
    %c0_31 = arith.constant 0 : index
    %c3_32 = arith.constant 3 : index
    %c0_33 = arith.constant 0 : index
    %102 = vector.load %arg5[%c0_31, %c3_32, %c0_33] : memref<2x8x32xf32, #tpu.memory_space<vmem>>, vector<2x1x32xf32>
    %103 = vector.shape_cast %102 : vector<2x1x32xf32> to vector<2x32xf32>
    %104 = vector.shape_cast %101 : vector<2x32xf32> to vector<2x1x32xf32>
    tpu.vector_store %arg5[%c0_31, %c3_32, %c0_33], %104 {strides = array<i32>} : memref<2x8x32xf32, #tpu.memory_space<vmem>>, vector<2x1x32xf32>,
    %105 = arith.truncf %101 : vector<2x32xf32> to vector<2x32xbf16>
    %c4 = arith.constant 4 : index
    %c0_34 = arith.constant 0 : index
    %c0_35 = arith.constant 0 : index
    %106 = vector.load %arg1[%c4, %c0_34, %c0_35] : memref<8x2x128xbf16, #tpu.memory_space<vmem>>, vector<1x2x128xbf16>
    %107 = vector.shape_cast %106 : vector<1x2x128xbf16> to vector<2x128xbf16>
    %cst_36 = arith.constant dense<0.000000e+00> : vector<2x128xf32>
    %108 = tpu.matmul %105, %5, %cst_36 {dimension_numbers = #tpu.dot_dimension_numbers<[1], [0], [0], [1], [0, 0, 1, 1], [], []>} : vector<2x32xbf16>, vector<32x128xbf16>, vector<2x128xf32> -> vector<2x128xf32>
    %109 = arith.extf %107 : vector<2x128xbf16> to vector<2x128xf32>
    %110 = arith.addf %109, %108 : vector<2x128xf32>
    %111 = vector.extract_strided_slice %110 {offsets = [0, 0], sizes = [2, 96], strides = [1, 1]} : vector<2x128xf32> to vector<2x96xf32>
    %112 = arith.negf %111 : vector<2x96xf32>
    %113 = math.exp %112 : vector<2x96xf32>
    %cst_37 = arith.constant 1.000000e+00 : f32
    %114 = vector.broadcast %cst_37 : f32 to vector<2x96xf32>
    %115 = arith.addf %114, %113 : vector<2x96xf32>
    %116 = arith.divf %114, %115 : vector<2x96xf32>
    %117 = vector.extract_strided_slice %110 {offsets = [0, 96], sizes = [2, 32], strides = [1, 1]} : vector<2x128xf32> to vector<2x32xf32>
    %118 = math.tanh %117 : vector<2x32xf32>
    %119 = vector.extract_strided_slice %116 {offsets = [0, 0], sizes = [2, 32], strides = [1, 1]} : vector<2x96xf32> to vector<2x32xf32>
    %120 = vector.extract_strided_slice %116 {offsets = [0, 32], sizes = [2, 32], strides = [1, 1]} : vector<2x96xf32> to vector<2x32xf32>
    %121 = vector.extract_strided_slice %116 {offsets = [0, 64], sizes = [2, 32], strides = [1, 1]} : vector<2x96xf32> to vector<2x32xf32>
    %122 = arith.mulf %120, %99 : vector<2x32xf32>
    %123 = arith.mulf %119, %118 : vector<2x32xf32>
    %124 = arith.addf %122, %123 : vector<2x32xf32>
    %125 = math.tanh %124 : vector<2x32xf32>
    %126 = arith.mulf %121, %125 : vector<2x32xf32>
    %c0_38 = arith.constant 0 : index
    %c4_39 = arith.constant 4 : index
    %c0_40 = arith.constant 0 : index
    %127 = vector.load %arg5[%c0_38, %c4_39, %c0_40] : memref<2x8x32xf32, #tpu.memory_space<vmem>>, vector<2x1x32xf32>
    %128 = vector.shape_cast %127 : vector<2x1x32xf32> to vector<2x32xf32>
    %129 = vector.shape_cast %126 : vector<2x32xf32> to vector<2x1x32xf32>
    tpu.vector_store %arg5[%c0_38, %c4_39, %c0_40], %129 {strides = array<i32>} : memref<2x8x32xf32, #tpu.memory_space<vmem>>, vector<2x1x32xf32>,
    %130 = arith.truncf %126 : vector<2x32xf32> to vector<2x32xbf16>
    %c5 = arith.constant 5 : index
    %c0_41 = arith.constant 0 : index
    %c0_42 = arith.constant 0 : index
    %131 = vector.load %arg1[%c5, %c0_41, %c0_42] : memref<8x2x128xbf16, #tpu.memory_space<vmem>>, vector<1x2x128xbf16>
    %132 = vector.shape_cast %131 : vector<1x2x128xbf16> to vector<2x128xbf16>
    %cst_43 = arith.constant dense<0.000000e+00> : vector<2x128xf32>
    %133 = tpu.matmul %130, %5, %cst_43 {dimension_numbers = #tpu.dot_dimension_numbers<[1], [0], [0], [1], [0, 0, 1, 1], [], []>} : vector<2x32xbf16>, vector<32x128xbf16>, vector<2x128xf32> -> vector<2x128xf32>
    %134 = arith.extf %132 : vector<2x128xbf16> to vector<2x128xf32>
    %135 = arith.addf %134, %133 : vector<2x128xf32>
    %136 = vector.extract_strided_slice %135 {offsets = [0, 0], sizes = [2, 96], strides = [1, 1]} : vector<2x128xf32> to vector<2x96xf32>
    %137 = arith.negf %136 : vector<2x96xf32>
    %138 = math.exp %137 : vector<2x96xf32>
    %cst_44 = arith.constant 1.000000e+00 : f32
    %139 = vector.broadcast %cst_44 : f32 to vector<2x96xf32>
    %140 = arith.addf %139, %138 : vector<2x96xf32>
    %141 = arith.divf %139, %140 : vector<2x96xf32>
    %142 = vector.extract_strided_slice %135 {offsets = [0, 96], sizes = [2, 32], strides = [1, 1]} : vector<2x128xf32> to vector<2x32xf32>
    %143 = math.tanh %142 : vector<2x32xf32>
    %144 = vector.extract_strided_slice %141 {offsets = [0, 0], sizes = [2, 32], strides = [1, 1]} : vector<2x96xf32> to vector<2x32xf32>
    %145 = vector.extract_strided_slice %141 {offsets = [0, 32], sizes = [2, 32], strides = [1, 1]} : vector<2x96xf32> to vector<2x32xf32>
    %146 = vector.extract_strided_slice %141 {offsets = [0, 64], sizes = [2, 32], strides = [1, 1]} : vector<2x96xf32> to vector<2x32xf32>
    %147 = arith.mulf %145, %124 : vector<2x32xf32>
    %148 = arith.mulf %144, %143 : vector<2x32xf32>
    %149 = arith.addf %147, %148 : vector<2x32xf32>
    %150 = math.tanh %149 : vector<2x32xf32>
    %151 = arith.mulf %146, %150 : vector<2x32xf32>
    %c0_45 = arith.constant 0 : index
    %c5_46 = arith.constant 5 : index
    %c0_47 = arith.constant 0 : index
    %152 = vector.load %arg5[%c0_45, %c5_46, %c0_47] : memref<2x8x32xf32, #tpu.memory_space<vmem>>, vector<2x1x32xf32>
    %153 = vector.shape_cast %152 : vector<2x1x32xf32> to vector<2x32xf32>
    %154 = vector.shape_cast %151 : vector<2x32xf32> to vector<2x1x32xf32>
    tpu.vector_store %arg5[%c0_45, %c5_46, %c0_47], %154 {strides = array<i32>} : memref<2x8x32xf32, #tpu.memory_space<vmem>>, vector<2x1x32xf32>,
    %155 = arith.truncf %151 : vector<2x32xf32> to vector<2x32xbf16>
    %c6 = arith.constant 6 : index
    %c0_48 = arith.constant 0 : index
    %c0_49 = arith.constant 0 : index
    %156 = vector.load %arg1[%c6, %c0_48, %c0_49] : memref<8x2x128xbf16, #tpu.memory_space<vmem>>, vector<1x2x128xbf16>
    %157 = vector.shape_cast %156 : vector<1x2x128xbf16> to vector<2x128xbf16>
    %cst_50 = arith.constant dense<0.000000e+00> : vector<2x128xf32>
    %158 = tpu.matmul %155, %5, %cst_50 {dimension_numbers = #tpu.dot_dimension_numbers<[1], [0], [0], [1], [0, 0, 1, 1], [], []>} : vector<2x32xbf16>, vector<32x128xbf16>, vector<2x128xf32> -> vector<2x128xf32>
    %159 = arith.extf %157 : vector<2x128xbf16> to vector<2x128xf32>
    %160 = arith.addf %159, %158 : vector<2x128xf32>
    %161 = vector.extract_strided_slice %160 {offsets = [0, 0], sizes = [2, 96], strides = [1, 1]} : vector<2x128xf32> to vector<2x96xf32>
    %162 = arith.negf %161 : vector<2x96xf32>
    %163 = math.exp %162 : vector<2x96xf32>
    %cst_51 = arith.constant 1.000000e+00 : f32
    %164 = vector.broadcast %cst_51 : f32 to vector<2x96xf32>
    %165 = arith.addf %164, %163 : vector<2x96xf32>
    %166 = arith.divf %164, %165 : vector<2x96xf32>
    %167 = vector.extract_strided_slice %160 {offsets = [0, 96], sizes = [2, 32], strides = [1, 1]} : vector<2x128xf32> to vector<2x32xf32>
    %168 = math.tanh %167 : vector<2x32xf32>
    %169 = vector.extract_strided_slice %166 {offsets = [0, 0], sizes = [2, 32], strides = [1, 1]} : vector<2x96xf32> to vector<2x32xf32>
    %170 = vector.extract_strided_slice %166 {offsets = [0, 32], sizes = [2, 32], strides = [1, 1]} : vector<2x96xf32> to vector<2x32xf32>
    %171 = vector.extract_strided_slice %166 {offsets = [0, 64], sizes = [2, 32], strides = [1, 1]} : vector<2x96xf32> to vector<2x32xf32>
    %172 = arith.mulf %170, %149 : vector<2x32xf32>
    %173 = arith.mulf %169, %168 : vector<2x32xf32>
    %174 = arith.addf %172, %173 : vector<2x32xf32>
    %175 = math.tanh %174 : vector<2x32xf32>
    %176 = arith.mulf %171, %175 : vector<2x32xf32>
    %c0_52 = arith.constant 0 : index
    %c6_53 = arith.constant 6 : index
    %c0_54 = arith.constant 0 : index
    %177 = vector.load %arg5[%c0_52, %c6_53, %c0_54] : memref<2x8x32xf32, #tpu.memory_space<vmem>>, vector<2x1x32xf32>
    %178 = vector.shape_cast %177 : vector<2x1x32xf32> to vector<2x32xf32>
    %179 = vector.shape_cast %176 : vector<2x32xf32> to vector<2x1x32xf32>
    tpu.vector_store %arg5[%c0_52, %c6_53, %c0_54], %179 {strides = array<i32>} : memref<2x8x32xf32, #tpu.memory_space<vmem>>, vector<2x1x32xf32>,
    %180 = arith.truncf %176 : vector<2x32xf32> to vector<2x32xbf16>
    %c7 = arith.constant 7 : index
    %c0_55 = arith.constant 0 : index
    %c0_56 = arith.constant 0 : index
    %181 = vector.load %arg1[%c7, %c0_55, %c0_56] : memref<8x2x128xbf16, #tpu.memory_space<vmem>>, vector<1x2x128xbf16>
    %182 = vector.shape_cast %181 : vector<1x2x128xbf16> to vector<2x128xbf16>
    %cst_57 = arith.constant dense<0.000000e+00> : vector<2x128xf32>
    %183 = tpu.matmul %180, %5, %cst_57 {dimension_numbers = #tpu.dot_dimension_numbers<[1], [0], [0], [1], [0, 0, 1, 1], [], []>} : vector<2x32xbf16>, vector<32x128xbf16>, vector<2x128xf32> -> vector<2x128xf32>
    %184 = arith.extf %182 : vector<2x128xbf16> to vector<2x128xf32>
    %185 = arith.addf %184, %183 : vector<2x128xf32>
    %186 = vector.extract_strided_slice %185 {offsets = [0, 0], sizes = [2, 96], strides = [1, 1]} : vector<2x128xf32> to vector<2x96xf32>
    %187 = arith.negf %186 : vector<2x96xf32>
    %188 = math.exp %187 : vector<2x96xf32>
    %cst_58 = arith.constant 1.000000e+00 : f32
    %189 = vector.broadcast %cst_58 : f32 to vector<2x96xf32>
    %190 = arith.addf %189, %188 : vector<2x96xf32>
    %191 = arith.divf %189, %190 : vector<2x96xf32>
    %192 = vector.extract_strided_slice %185 {offsets = [0, 96], sizes = [2, 32], strides = [1, 1]} : vector<2x128xf32> to vector<2x32xf32>
    %193 = math.tanh %192 : vector<2x32xf32>
    %194 = vector.extract_strided_slice %191 {offsets = [0, 0], sizes = [2, 32], strides = [1, 1]} : vector<2x96xf32> to vector<2x32xf32>
    %195 = vector.extract_strided_slice %191 {offsets = [0, 32], sizes = [2, 32], strides = [1, 1]} : vector<2x96xf32> to vector<2x32xf32>
    %196 = vector.extract_strided_slice %191 {offsets = [0, 64], sizes = [2, 32], strides = [1, 1]} : vector<2x96xf32> to vector<2x32xf32>
    %197 = arith.mulf %195, %174 : vector<2x32xf32>
    %198 = arith.mulf %194, %193 : vector<2x32xf32>
    %199 = arith.addf %197, %198 : vector<2x32xf32>
    %200 = math.tanh %199 : vector<2x32xf32>
    %201 = arith.mulf %196, %200 : vector<2x32xf32>
    %c0_59 = arith.constant 0 : index
    %c7_60 = arith.constant 7 : index
    %c0_61 = arith.constant 0 : index
    %202 = vector.load %arg5[%c0_59, %c7_60, %c0_61] : memref<2x8x32xf32, #tpu.memory_space<vmem>>, vector<2x1x32xf32>
    %203 = vector.shape_cast %202 : vector<2x1x32xf32> to vector<2x32xf32>
    %204 = vector.shape_cast %201 : vector<2x32xf32> to vector<2x1x32xf32>
    tpu.vector_store %arg5[%c0_59, %c7_60, %c0_61], %204 {strides = array<i32>} : memref<2x8x32xf32, #tpu.memory_space<vmem>>, vector<2x1x32xf32>,
    %205 = arith.truncf %201 : vector<2x32xf32> to vector<2x32xbf16>
    %c0_62 = arith.constant 0 : index
    %c0_63 = arith.constant 0 : index
    %206 = vector.load %arg6[%c0_62, %c0_63] : memref<2x32xbf16, #tpu.memory_space<vmem>>, vector<2x32xbf16>
    tpu.vector_store %arg6[%c0_62, %c0_63], %205 {strides = array<i32>} : memref<2x32xbf16, #tpu.memory_space<vmem>>, vector<2x32xbf16>,
    %c0_64 = arith.constant 0 : index
    %c0_65 = arith.constant 0 : index
    %207 = vector.load %arg7[%c0_64, %c0_65] : memref<2x32xf32, #tpu.memory_space<vmem>>, vector<2x32xf32>
    tpu.vector_store %arg7[%c0_64, %c0_65], %199 {strides = array<i32>} : memref<2x32xf32, #tpu.memory_space<vmem>>, vector<2x32xf32>,
    return
  }
  func.func @transform_0(%arg0: i32) -> (i32, i32, i32) {
    %c0_i32 = arith.constant 0 : i32
    %c0_i32_0 = arith.constant 0 : i32
    %c0_i32_1 = arith.constant 0 : i32
    return %arg0, %c0_i32, %c0_i32_0 : i32, i32, i32
  }
  func.func @transform_1(%arg0: i32) -> (i32, i32) {
    %c0_i32 = arith.constant 0 : i32
    %c0_i32_0 = arith.constant 0 : i32
    %c0_i32_1 = arith.constant 0 : i32
    return %c0_i32, %c0_i32_0 : i32, i32
  }
  func.func @transform_2(%arg0: i32) -> (i32, i32) {
    %c0_i32 = arith.constant 0 : i32
    %c0_i32_0 = arith.constant 0 : i32
    %c0_i32_1 = arith.constant 0 : i32
    return %c0_i32, %c0_i32_0 : i32, i32
  }
  func.func @transform_3(%arg0: i32) -> (i32, i32) {
    %c0_i32 = arith.constant 0 : i32
    %c0_i32_0 = arith.constant 0 : i32
    %c0_i32_1 = arith.constant 0 : i32
    return %c0_i32, %c0_i32_0 : i32, i32
  }
  func.func @transform_4(%arg0: i32) -> (i32, i32, i32) {
    %c0_i32 = arith.constant 0 : i32
    %c0_i32_0 = arith.constant 0 : i32
    %c0_i32_1 = arith.constant 0 : i32
    return %c0_i32, %arg0, %c0_i32_0 : i32, i32, i32
  }
}

</mosaic_0001>

<llo_original>
// kernel: question_lstm_forward.1
$region0: #{question_lstm_forward.1}
  #allocation0 [shape = 'u32[]', space=smem, size = 0x4, offset = 0x4, fixed_abs, tag = 'smem constant byte address 0x4 - core index']
  #allocation1 [shape = 'u32[144,128]{1,0:T(1,128)}', space=vmem, size = 0x12000, scoped, tag = 'internal scratch']
  #allocation2 [shape = 'bf16[2,32]{1,0:T(2,128)(2,1)}', space=vmem, size = 0x200, scoped, tag = 'scratch operand']
  #allocation3 [shape = 'f32[2,32]{1,0:T(2,128)}', space=vmem, size = 0x400, scoped, tag = 'scratch operand']
  %s0 = inlined_call_operand.vmem [shape: bf16[8,2,128], index: 0, kind: input, shape index: {}]
  %s1 = inlined_call_operand.vmem [shape: bf16[32,128], index: 1, kind: input, shape index: {}]
  %s2 = inlined_call_operand.vmem [shape: bf16[2,32], index: 2, kind: input, shape index: {}]
  %s3 = inlined_call_operand.vmem [shape: f32[2,32], index: 3, kind: input, shape index: {}]
  %s4 = inlined_call_operand.hbm [shape: f32[2,8,32], index: 4, kind: output, shape index: {}]
  %s5 = sld [smem:[#allocation0]]
  $region30: #{question_lstm_forward.1} parent=0
    _
  %s7 = ssub.s32 1, %s5
  %s8 = scalar_select 0, %s7, %s5
  $region1: #{question_lstm_forward.1} parent=0
    #allocation4 [shape = 'u8[8192]{0}', space=vmem, size = 0x2000, scoped, tag = 'output window, operand 0, single buffered']
    #allocation5 [shape = 's32[1]{0}', space=sflag, size = 0x4, scoped, tag = 'scoped memory for question_lstm_forward.1']
    %9 = vsyncpa [#allocation5], 0
    // Predicated region
    $region2: #{question_lstm_forward.1} parent=1 // pred_check
      _
    $region3: #{question_lstm_forward.1} parent=1 // pred_check_branch
      %11 = sbr.rel (0) target = $region5
    $region4: #{question_lstm_forward.1} parent=1 // pred_region
      _
    $region5: #{question_lstm_forward.1} parent=1 // pred_fallthru
      _
    // Predicated region
    $region6: #{question_lstm_forward.1} parent=1 // pred_check
      _
    $region7: #{question_lstm_forward.1} parent=1 // pred_check_branch
      %13 = sbr.rel (0) target = $region9
    $region8: #{question_lstm_forward.1} parent=1 // pred_region
      _
    $region9: #{question_lstm_forward.1} parent=1 // pred_fallthru
      _
    // Predicated region
    $region10: #{question_lstm_forward.1} parent=1 // pred_check
      _
    $region11: #{question_lstm_forward.1} parent=1 // pred_check_branch
      %15 = sbr.rel (0) target = $region13
    $region12: #{question_lstm_forward.1} parent=1 // pred_region
      _
    $region13: #{question_lstm_forward.1} parent=1 // pred_fallthru
      _
    // Predicated region
    $region14: #{question_lstm_forward.1} parent=1 // pred_check
      _
    $region15: #{question_lstm_forward.1} parent=1 // pred_check_branch
      %17 = sbr.rel (0) target = $region17
    $region16: #{question_lstm_forward.1} parent=1 // pred_region
      _
    $region17: #{question_lstm_forward.1} parent=1 // pred_fallthru
      _
    %p19 = scmp.eq.s32.totalorder 0, 0
    // Predicated region
    $region18: #{question_lstm_forward.1} parent=1 // pred_check
      %p20 = pneg %p19
    $region19: #{question_lstm_forward.1} parent=1 // pred_check_branch
      %22 = sbr.rel (%p20) target = $region21
    $region20: #{question_lstm_forward.1} parent=1 // pred_region
      %v23 = vld [vmem:[%s2] sm:$0x1]
      %vm24 = vcmask 253952
      %25 = vst.msk [vmem:[#allocation2] sm:$0x1] %vm24, %v23
      %v26 = vld [vmem:[%s3] sm:$0x3]
      %vm27 = vcmask 254976
      %28 = vst.msk [vmem:[#allocation3] sm:$0x3] %vm27, %v26
    $region21: #{question_lstm_forward.1} parent=1 // pred_fallthru
      _
    %v29 = vld [vmem:[#allocation2] sm:$0x1]
    %v30 = vld [vmem:[#allocation3] sm:$0x3]
    %v31 = vld [vmem:[%s1] sm:$0xf]
    %v32 = vld [vmem:[%s1 + $0x4] sm:$0xf]
    %v33 = vld [vmem:[%s1 + $0x8] sm:$0xf]
    %v34 = vld [vmem:[%s1 + $0xc] sm:$0xf]
    %v35 = vld [vmem:[%s0] sm:$0x1]
    %v40 = vunpack.c.l.b16 %v31
    %v41 = vunpack.c.l.b16 %v32
    %v42 = vunpack.c.l.b16 %v33
    %v43 = vunpack.c.l.b16 %v34
    %v44 = vpack.c.b16 %v41, %v40
    %v45 = vpack.c.b16 %v43, %v42
    %vm48 = vcmask 261120
    %v50 = vsel %vm48, %v29, 0
    %52 = vmatprep.subr.bf16.mxu0 0
    %53 = vmatpush1.bf16.msra.mxu0 %v44
    %54 = vmatprep.subr.bf16.mxu0 0
    %55 = vmatpush1.bf16.msra.mxu0 %v45
    %56 = vmatprep.subr.bf16.mxu0 0
    %57 = vmatpush1.bf16.msra.mxu0 0
    %58 = vmatprep.subr.bf16.mxu0 0
    %59 = vmatpush1.bf16.msra.mxu0 0
    %60 = vmatprep.subr.bf16.mxu0 0
    %61 = vmatpush1.bf16.msra.mxu0 0
    %62 = vmatprep.subr.bf16.mxu0 0
    %63 = vmatpush1.bf16.msra.mxu0 0
    %64 = vmatprep.subr.bf16.mxu0 0
    %65 = vmatpush1.bf16.msra.mxu0 0
    %66 = vmatprep.subr.bf16.mxu0 0
    %67 = vmatpush1.bf16.msra.mxu0 0
    %68 = vmatprep.subr.bf16.mxu0 0
    %69 = vmatpush1.bf16.msra.mxu0 0
    %70 = vmatprep.subr.bf16.mxu0 0
    %71 = vmatpush1.bf16.msra.mxu0 0
    %72 = vmatprep.subr.bf16.mxu0 0
    %73 = vmatpush1.bf16.msra.mxu0 0
    %74 = vmatprep.subr.bf16.mxu0 0
    %75 = vmatpush1.bf16.msra.mxu0 0
    %76 = vmatprep.subr.bf16.mxu0 0
    %77 = vmatpush1.bf16.msra.mxu0 0
    %78 = vmatprep.subr.bf16.mxu0 0
    %79 = vmatpush1.bf16.msra.mxu0 0
    %80 = vmatprep.subr.bf16.mxu0 0
    %81 = vmatpush1.bf16.msra.mxu0 0
    %82 = vmatprep.subr.bf16.mxu0 0
    %83 = vmatpush1.bf16.msra.mxu0 0
    %84 = vmatprep.mubr.bf16.mxu0 0
    %85 = vmatmul.mubr.bf16.gmra.mrb[0].mxu0 %v50
    %v86 = vpop.f32.mrb[0].mxu0
    %v87 = vadd.f32 0.0, %v86
    %v88 = vpop.f32.mrb[0].mxu0
    %v89 = vpop.f32.mrb[0].mxu0
    %v90 = vpop.f32.mrb[0].mxu0
    %91 = vdwg.mxu0
    %v92 = vunpack.c.l.bf16 %v35
    %v93 = vadd.f32 %v92, %v87
    %v94 = vxor.u32 %v93, 2147483648
    %v95 = vmul.f32 %v94, 1.442695
    %v96 = vpow.pop %v95
    %v97 = vadd.f32 %v96, 1.0
    %v98 = vrcp.pop %v97
    %v99 = vmul.f32 1.0, %v98
    %v100 = vtanh.pop %v93
    %v103 = vunpack.c.l.s4 1983009808
    %v104 = vunpack.c.0.s8 %v103
    %v105 = vlaneseq
    %v106 = vshrl.u32 %v105, 7
    %v107 = vsub.s32 %v104, %v106
    %v108 = vrot.slane %v30, %v107
    %109 = vrot.lane.b32.xlu0 %v108, 32
    %v110 = vpop.permute.xlu0 %109
    %v112 = vmul.f32 %v99, %v110
    %114 = vrot.lane.b32.xlu0 %v100, 32
    %v115 = vpop.permute.xlu0 %114
    %v117 = vmul.f32 %v99, %v115
    %119 = vrot.lane.b32.xlu0 %v117, 32
    %v120 = vpop.permute.xlu0 %119
    %v122 = vadd.f32 %v112, %v120
    %v123 = vtanh.pop %v122
    %125 = vrot.lane.b32.xlu0 %v123, 32
    %v126 = vpop.permute.xlu0 %125
    %v128 = vmul.f32 %v99, %v126
    %v131 = vunpack.c.l.s4 1966171168
    %v132 = vunpack.c.0.s8 %v131
    %v133 = vlaneseq
    %v134 = vshrl.u32 %v133, 7
    %v135 = vsub.s32 %v132, %v134
    %v136 = vrot.slane %v128, %v135
    %v137 = vcombine.high %v136, %v136
    %v138 = vlaneseq
    %v139 = vshrl.u32 %v138, 7
    %v140 = vsub.s32 0, %v139
    %v141 = vrot.slane %v136, %v140
    %v142 = vlaneseq
    %v143 = vshrl.u32 %v142, 7
    %v144 = vsub.s32 0, %v143
    %v145 = vrot.slane %v137, %v144
    %146 = vrot.lane.b32.xlu0 %v141, 64
    %v147 = vpop.permute.xlu0 %146
    %148 = vrot.lane.b32.xlu0 %v145, 64
    %v149 = vpop.permute.xlu0 %148
    %vm152 = vcmask 253952
    %153 = vst.msk [vmem:[#allocation4] sm:$0x1] %vm152, %v147
    %154 = vst.msk [vmem:[#allocation4 + $0x8] sm:$0x1] %vm152, %v149
    %v155 = vpack.c.bf16 %v128, %v128
    %s156 = scalar_lea.vmem %s0, 1
    %v157 = vld [vmem:[%s156] sm:$0x1]
    %159 = vrot.lane.b32.xlu0 %v155, 64
    %v160 = vpop.permute.xlu0 %159
    %v162 = vsel %vm48, %v160, 0
    %164 = vmatprep.subr.bf16.mxu0 0
    %165 = vmatpush1.bf16.msra.mxu0 %v44
    %166 = vmatprep.subr.bf16.mxu0 0
    %167 = vmatpush1.bf16.msra.mxu0 %v45
    %168 = vmatprep.subr.bf16.mxu0 0
    %169 = vmatpush1.bf16.msra.mxu0 0
    %170 = vmatprep.subr.bf16.mxu0 0
    %171 = vmatpush1.bf16.msra.mxu0 0
    %172 = vmatprep.subr.bf16.mxu0 0
    %173 = vmatpush1.bf16.msra.mxu0 0
    %174 = vmatprep.subr.bf16.mxu0 0
    %175 = vmatpush1.bf16.msra.mxu0 0
    %176 = vmatprep.subr.bf16.mxu0 0
    %177 = vmatpush1.bf16.msra.mxu0 0
    %178 = vmatprep.subr.bf16.mxu0 0
    %179 = vmatpush1.bf16.msra.mxu0 0
    %180 = vmatprep.subr.bf16.mxu0 0
    %181 = vmatpush1.bf16.msra.mxu0 0
    %182 = vmatprep.subr.bf16.mxu0 0
    %183 = vmatpush1.bf16.msra.mxu0 0
    %184 = vmatprep.subr.bf16.mxu0 0
    %185 = vmatpush1.bf16.msra.mxu0 0
    %186 = vmatprep.subr.bf16.mxu0 0
    %187 = vmatpush1.bf16.msra.mxu0 0
    %188 = vmatprep.subr.bf16.mxu0 0
    %189 = vmatpush1.bf16.msra.mxu0 0
    %190 = vmatprep.subr.bf16.mxu0 0
    %191 = vmatpush1.bf16.msra.mxu0 0
    %192 = vmatprep.subr.bf16.mxu0 0
    %193 = vmatpush1.bf16.msra.mxu0 0
    %194 = vmatprep.subr.bf16.mxu0 0
    %195 = vmatpush1.bf16.msra.mxu0 0
    %196 = vmatprep.mubr.bf16.mxu0 0
    %197 = vmatmul.mubr.bf16.gmra.mrb[0].mxu0 %v162
    %v198 = vpop.f32.mrb[0].mxu0
    %v199 = vadd.f32 0.0, %v198
    %v200 = vpop.f32.mrb[0].mxu0
    %v201 = vpop.f32.mrb[0].mxu0
    %v202 = vpop.f32.mrb[0].mxu0
    %203 = vdwg.mxu0
    %v204 = vunpack.c.l.bf16 %v157
    %v205 = vadd.f32 %v204, %v199
    %v206 = vxor.u32 %v205, 2147483648
    %v207 = vmul.f32 %v206, 1.442695
    %v208 = vpow.pop %v207
    %v209 = vadd.f32 %v208, 1.0
    %v210 = vrcp.pop %v209
    %v211 = vmul.f32 1.0, %v210
    %v212 = vtanh.pop %v205
    %v213 = vmul.f32 %v211, %v122
    %215 = vrot.lane.b32.xlu0 %v212, 32
    %v216 = vpop.permute.xlu0 %215
    %v218 = vmul.f32 %v211, %v216
    %220 = vrot.lane.b32.xlu0 %v218, 32
    %v221 = vpop.permute.xlu0 %220
    %v223 = vadd.f32 %v213, %v221
    %v224 = vtanh.pop %v223
    %226 = vrot.lane.b32.xlu0 %v224, 32
    %v227 = vpop.permute.xlu0 %226
    %v229 = vmul.f32 %v211, %v227
    %v232 = vunpack.c.l.s4 1966171168
    %v233 = vunpack.c.0.s8 %v232
    %v234 = vlaneseq
    %v235 = vshrl.u32 %v234, 7
    %v236 = vsub.s32 %v233, %v235
    %v237 = vrot.slane %v229, %v236
    %v238 = vcombine.high %v237, %v237
    %v239 = vlaneseq
    %v240 = vshrl.u32 %v239, 7
    %v241 = vsub.s32 0, %v240
    %v242 = vrot.slane %v237, %v241
    %v243 = vlaneseq
    %v244 = vshrl.u32 %v243, 7
    %v245 = vsub.s32 0, %v244
    %v246 = vrot.slane %v238, %v245
    %247 = vrot.lane.b32.xlu0 %v242, 64
    %v248 = vpop.permute.xlu0 %247
    %249 = vrot.lane.b32.xlu0 %v246, 64
    %v250 = vpop.permute.xlu0 %249
    %253 = vst.msk [vmem:[#allocation4 + $0x1] sm:$0x1] %vm152, %v248
    %254 = vst.msk [vmem:[#allocation4 + $0x9] sm:$0x1] %vm152, %v250
    %v255 = vpack.c.bf16 %v229, %v229
    %s256 = scalar_lea.vmem %s0, 2
    %v257 = vld [vmem:[%s256] sm:$0x1]
    %259 = vrot.lane.b32.xlu0 %v255, 64
    %v260 = vpop.permute.xlu0 %259
    %v262 = vsel %vm48, %v260, 0
    %264 = vmatprep.subr.bf16.mxu0 0
    %265 = vmatpush1.bf16.msra.mxu0 %v44
    %266 = vmatprep.subr.bf16.mxu0 0
    %267 = vmatpush1.bf16.msra.mxu0 %v45
    %268 = vmatprep.subr.bf16.mxu0 0
    %269 = vmatpush1.bf16.msra.mxu0 0
    %270 = vmatprep.subr.bf16.mxu0 0
    %271 = vmatpush1.bf16.msra.mxu0 0
    %272 = vmatprep.subr.bf16.mxu0 0
    %273 = vmatpush1.bf16.msra.mxu0 0
    %274 = vmatprep.subr.bf16.mxu0 0
    %275 = vmatpush1.bf16.msra.mxu0 0
    %276 = vmatprep.subr.bf16.mxu0 0
    %277 = vmatpush1.bf16.msra.mxu0 0
    %278 = vmatprep.subr.bf16.mxu0 0
    %279 = vmatpush1.bf16.msra.mxu0 0
    %280 = vmatprep.subr.bf16.mxu0 0
    %281 = vmatpush1.bf16.msra.mxu0 0
    %282 = vmatprep.subr.bf16.mxu0 0
    %283 = vmatpush1.bf16.msra.mxu0 0
    %284 = vmatprep.subr.bf16.mxu0 0
    %285 = vmatpush1.bf16.msra.mxu0 0
    %286 = vmatprep.subr.bf16.mxu0 0
    %287 = vmatpush1.bf16.msra.mxu0 0
    %288 = vmatprep.subr.bf16.mxu0 0
    %289 = vmatpush1.bf16.msra.mxu0 0
    %290 = vmatprep.subr.bf16.mxu0 0
    %291 = vmatpush1.bf16.msra.mxu0 0
    %292 = vmatprep.subr.bf16.mxu0 0
    %293 = vmatpush1.bf16.msra.mxu0 0
    %294 = vmatprep.subr.bf16.mxu0 0
    %295 = vmatpush1.bf16.msra.mxu0 0
    %296 = vmatprep.mubr.bf16.mxu0 0
    %297 = vmatmul.mubr.bf16.gmra.mrb[0].mxu0 %v262
    %v298 = vpop.f32.mrb[0].mxu0
    %v299 = vadd.f32 0.0, %v298
    %v300 = vpop.f32.mrb[0].mxu0
    %v301 = vpop.f32.mrb[0].mxu0
    %v302 = vpop.f32.mrb[0].mxu0
    %303 = vdwg.mxu0
    %v304 = vunpack.c.l.bf16 %v257
    %v305 = vadd.f32 %v304, %v299
    %v306 = vxor.u32 %v305, 2147483648
    %v307 = vmul.f32 %v306, 1.442695
    %v308 = vpow.pop %v307
    %v309 = vadd.f32 %v308, 1.0
    %v310 = vrcp.pop %v309
    %v311 = vmul.f32 1.0, %v310
    %v312 = vtanh.pop %v305
    %v313 = vmul.f32 %v311, %v223
    %315 = vrot.lane.b32.xlu0 %v312, 32
    %v316 = vpop.permute.xlu0 %315
    %v318 = vmul.f32 %v311, %v316
    %320 = vrot.lane.b32.xlu0 %v318, 32
    %v321 = vpop.permute.xlu0 %320
    %v323 = vadd.f32 %v313, %v321
    %v324 = vtanh.pop %v323
    %326 = vrot.lane.b32.xlu0 %v324, 32
    %v327 = vpop.permute.xlu0 %326
    %v329 = vmul.f32 %v311, %v327
    %v332 = vunpack.c.l.s4 1966171168
    %v333 = vunpack.c.0.s8 %v332
    %v334 = vlaneseq
    %v335 = vshrl.u32 %v334, 7
    %v336 = vsub.s32 %v333, %v335
    %v337 = vrot.slane %v329, %v336
    %v338 = vcombine.high %v337, %v337
    %v339 = vlaneseq
    %v340 = vshrl.u32 %v339, 7
    %v341 = vsub.s32 0, %v340
    %v342 = vrot.slane %v337, %v341
    %v343 = vlaneseq
    %v344 = vshrl.u32 %v343, 7
    %v345 = vsub.s32 0, %v344
    %v346 = vrot.slane %v338, %v345
    %347 = vrot.lane.b32.xlu0 %v342, 64
    %v348 = vpop.permute.xlu0 %347
    %349 = vrot.lane.b32.xlu0 %v346, 64
    %v350 = vpop.permute.xlu0 %349
    %353 = vst.msk [vmem:[#allocation4 + $0x2] sm:$0x1] %vm152, %v348
    %354 = vst.msk [vmem:[#allocation4 + $0xa] sm:$0x1] %vm152, %v350
    %v355 = vpack.c.bf16 %v329, %v329
    %s356 = scalar_lea.vmem %s0, 3
    %v357 = vld [vmem:[%s356] sm:$0x1]
    %359 = vrot.lane.b32.xlu0 %v355, 64
    %v360 = vpop.permute.xlu0 %359
    %v362 = vsel %vm48, %v360, 0
    %364 = vmatprep.subr.bf16.mxu0 0
    %365 = vmatpush1.bf16.msra.mxu0 %v44
    %366 = vmatprep.subr.bf16.mxu0 0
    %367 = vmatpush1.bf16.msra.mxu0 %v45
    %368 = vmatprep.subr.bf16.mxu0 0
    %369 = vmatpush1.bf16.msra.mxu0 0
    %370 = vmatprep.subr.bf16.mxu0 0
    %371 = vmatpush1.bf16.msra.mxu0 0
    %372 = vmatprep.subr.bf16.mxu0 0
    %373 = vmatpush1.bf16.msra.mxu0 0
    %374 = vmatprep.subr.bf16.mxu0 0
    %375 = vmatpush1.bf16.msra.mxu0 0
    %376 = vmatprep.subr.bf16.mxu0 0
    %377 = vmatpush1.bf16.msra.mxu0 0
    %378 = vmatprep.subr.bf16.mxu0 0
    %379 = vmatpush1.bf16.msra.mxu0 0
    %380 = vmatprep.subr.bf16.mxu0 0
    %381 = vmatpush1.bf16.msra.mxu0 0
    %382 = vmatprep.subr.bf16.mxu0 0
    %383 = vmatpush1.bf16.msra.mxu0 0
    %384 = vmatprep.subr.bf16.mxu0 0
    %385 = vmatpush1.bf16.msra.mxu0 0
    %386 = vmatprep.subr.bf16.mxu0 0
    %387 = vmatpush1.bf16.msra.mxu0 0
    %388 = vmatprep.subr.bf16.mxu0 0
    %389 = vmatpush1.bf16.msra.mxu0 0
    %390 = vmatprep.subr.bf16.mxu0 0
    %391 = vmatpush1.bf16.msra.mxu0 0
    %392 = vmatprep.subr.bf16.mxu0 0
    %393 = vmatpush1.bf16.msra.mxu0 0
    %394 = vmatprep.subr.bf16.mxu0 0
    %395 = vmatpush1.bf16.msra.mxu0 0
    %396 = vmatprep.mubr.bf16.mxu0 0
    %397 = vmatmul.mubr.bf16.gmra.mrb[0].mxu0 %v362
    %v398 = vpop.f32.mrb[0].mxu0
    %v399 = vadd.f32 0.0, %v398
    %v400 = vpop.f32.mrb[0].mxu0
    %v401 = vpop.f32.mrb[0].mxu0
    %v402 = vpop.f32.mrb[0].mxu0
    %403 = vdwg.mxu0
    %v404 = vunpack.c.l.bf16 %v357
    %v405 = vadd.f32 %v404, %v399
    %v406 = vxor.u32 %v405, 2147483648
    %v407 = vmul.f32 %v406, 1.442695
    %v408 = vpow.pop %v407
    %v409 = vadd.f32 %v408, 1.0
    %v410 = vrcp.pop %v409
    %v411 = vmul.f32 1.0, %v410
    %v412 = vtanh.pop %v405
    %v413 = vmul.f32 %v411, %v323
    %415 = vrot.lane.b32.xlu0 %v412, 32
    %v416 = vpop.permute.xlu0 %415
    %v418 = vmul.f32 %v411, %v416
    %420 = vrot.lane.b32.xlu0 %v418, 32
    %v421 = vpop.permute.xlu0 %420
    %v423 = vadd.f32 %v413, %v421
    %v424 = vtanh.pop %v423
    %426 = vrot.lane.b32.xlu0 %v424, 32
    %v427 = vpop.permute.xlu0 %426
    %v429 = vmul.f32 %v411, %v427
    %v432 = vunpack.c.l.s4 1966171168
    %v433 = vunpack.c.0.s8 %v432
    %v434 = vlaneseq
    %v435 = vshrl.u32 %v434, 7
    %v436 = vsub.s32 %v433, %v435
    %v437 = vrot.slane %v429, %v436
    %v438 = vcombine.high %v437, %v437
    %v439 = vlaneseq
    %v440 = vshrl.u32 %v439, 7
    %v441 = vsub.s32 0, %v440
    %v442 = vrot.slane %v437, %v441
    %v443 = vlaneseq
    %v444 = vshrl.u32 %v443, 7
    %v445 = vsub.s32 0, %v444
    %v446 = vrot.slane %v438, %v445
    %447 = vrot.lane.b32.xlu0 %v442, 64
    %v448 = vpop.permute.xlu0 %447
    %449 = vrot.lane.b32.xlu0 %v446, 64
    %v450 = vpop.permute.xlu0 %449
    %453 = vst.msk [vmem:[#allocation4 + $0x3] sm:$0x1] %vm152, %v448
    %454 = vst.msk [vmem:[#allocation4 + $0xb] sm:$0x1] %vm152, %v450
    %v455 = vpack.c.bf16 %v429, %v429
    %s456 = scalar_lea.vmem %s0, 4
    %v457 = vld [vmem:[%s456] sm:$0x1]
    %459 = vrot.lane.b32.xlu0 %v455, 64
    %v460 = vpop.permute.xlu0 %459
    %v462 = vsel %vm48, %v460, 0
    %464 = vmatprep.subr.bf16.mxu0 0
    %465 = vmatpush1.bf16.msra.mxu0 %v44
    %466 = vmatprep.subr.bf16.mxu0 0
    %467 = vmatpush1.bf16.msra.mxu0 %v45
    %468 = vmatprep.subr.bf16.mxu0 0
    %469 = vmatpush1.bf16.msra.mxu0 0
    %470 = vmatprep.subr.bf16.mxu0 0
    %471 = vmatpush1.bf16.msra.mxu0 0
    %472 = vmatprep.subr.bf16.mxu0 0
    %473 = vmatpush1.bf16.msra.mxu0 0
    %474 = vmatprep.subr.bf16.mxu0 0
    %475 = vmatpush1.bf16.msra.mxu0 0
    %476 = vmatprep.subr.bf16.mxu0 0
    %477 = vmatpush1.bf16.msra.mxu0 0
    %478 = vmatprep.subr.bf16.mxu0 0
    %479 = vmatpush1.bf16.msra.mxu0 0
    %480 = vmatprep.subr.bf16.mxu0 0
    %481 = vmatpush1.bf16.msra.mxu0 0
    %482 = vmatprep.subr.bf16.mxu0 0
    %483 = vmatpush1.bf16.msra.mxu0 0
    %484 = vmatprep.subr.bf16.mxu0 0
    %485 = vmatpush1.bf16.msra.mxu0 0
    %486 = vmatprep.subr.bf16.mxu0 0
    %487 = vmatpush1.bf16.msra.mxu0 0
    %488 = vmatprep.subr.bf16.mxu0 0
    %489 = vmatpush1.bf16.msra.mxu0 0
    %490 = vmatprep.subr.bf16.mxu0 0
    %491 = vmatpush1.bf16.msra.mxu0 0
    %492 = vmatprep.subr.bf16.mxu0 0
    %493 = vmatpush1.bf16.msra.mxu0 0
    %494 = vmatprep.subr.bf16.mxu0 0
    %495 = vmatpush1.bf16.msra.mxu0 0
    %496 = vmatprep.mubr.bf16.mxu0 0
    %497 = vmatmul.mubr.bf16.gmra.mrb[0].mxu0 %v462
    %v498 = vpop.f32.mrb[0].mxu0
    %v499 = vadd.f32 0.0, %v498
    %v500 = vpop.f32.mrb[0].mxu0
    %v501 = vpop.f32.mrb[0].mxu0
    %v502 = vpop.f32.mrb[0].mxu0
    %503 = vdwg.mxu0
    %v504 = vunpack.c.l.bf16 %v457
    %v505 = vadd.f32 %v504, %v499
    %v506 = vxor.u32 %v505, 2147483648
    %v507 = vmul.f32 %v506, 1.442695
    %v508 = vpow.pop %v507
    %v509 = vadd.f32 %v508, 1.0
    %v510 = vrcp.pop %v509
    %v511 = vmul.f32 1.0, %v510
    %v512 = vtanh.pop %v505
    %v513 = vmul.f32 %v511, %v423
    %515 = vrot.lane.b32.xlu0 %v512, 32
    %v516 = vpop.permute.xlu0 %515
    %v518 = vmul.f32 %v511, %v516
    %520 = vrot.lane.b32.xlu0 %v518, 32
    %v521 = vpop.permute.xlu0 %520
    %v523 = vadd.f32 %v513, %v521
    %v524 = vtanh.pop %v523
    %526 = vrot.lane.b32.xlu0 %v524, 32
    %v527 = vpop.permute.xlu0 %526
    %v529 = vmul.f32 %v511, %v527
    %v532 = vunpack.c.l.s4 1966171168
    %v533 = vunpack.c.0.s8 %v532
    %v534 = vlaneseq
    %v535 = vshrl.u32 %v534, 7
    %v536 = vsub.s32 %v533, %v535
    %v537 = vrot.slane %v529, %v536
    %v538 = vcombine.high %v537, %v537
    %v539 = vlaneseq
    %v540 = vshrl.u32 %v539, 7
    %v541 = vsub.s32 0, %v540
    %v542 = vrot.slane %v537, %v541
    %v543 = vlaneseq
    %v544 = vshrl.u32 %v543, 7
    %v545 = vsub.s32 0, %v544
    %v546 = vrot.slane %v538, %v545
    %547 = vrot.lane.b32.xlu0 %v542, 64
    %v548 = vpop.permute.xlu0 %547
    %549 = vrot.lane.b32.xlu0 %v546, 64
    %v550 = vpop.permute.xlu0 %549
    %553 = vst.msk [vmem:[#allocation4 + $0x4] sm:$0x1] %vm152, %v548
    %554 = vst.msk [vmem:[#allocation4 + $0xc] sm:$0x1] %vm152, %v550
    %v555 = vpack.c.bf16 %v529, %v529
    %s556 = scalar_lea.vmem %s0, 5
    %v557 = vld [vmem:[%s556] sm:$0x1]
    %559 = vrot.lane.b32.xlu0 %v555, 64
    %v560 = vpop.permute.xlu0 %559
    %v562 = vsel %vm48, %v560, 0
    %564 = vmatprep.subr.bf16.mxu0 0
    %565 = vmatpush1.bf16.msra.mxu0 %v44
    %566 = vmatprep.subr.bf16.mxu0 0
    %567 = vmatpush1.bf16.msra.mxu0 %v45
    %568 = vmatprep.subr.bf16.mxu0 0
    %569 = vmatpush1.bf16.msra.mxu0 0
    %570 = vmatprep.subr.bf16.mxu0 0
    %571 = vmatpush1.bf16.msra.mxu0 0
    %572 = vmatprep.subr.bf16.mxu0 0
    %573 = vmatpush1.bf16.msra.mxu0 0
    %574 = vmatprep.subr.bf16.mxu0 0
    %575 = vmatpush1.bf16.msra.mxu0 0
    %576 = vmatprep.subr.bf16.mxu0 0
    %577 = vmatpush1.bf16.msra.mxu0 0
    %578 = vmatprep.subr.bf16.mxu0 0
    %579 = vmatpush1.bf16.msra.mxu0 0
    %580 = vmatprep.subr.bf16.mxu0 0
    %581 = vmatpush1.bf16.msra.mxu0 0
    %582 = vmatprep.subr.bf16.mxu0 0
    %583 = vmatpush1.bf16.msra.mxu0 0
    %584 = vmatprep.subr.bf16.mxu0 0
    %585 = vmatpush1.bf16.msra.mxu0 0
    %586 = vmatprep.subr.bf16.mxu0 0
    %587 = vmatpush1.bf16.msra.mxu0 0
    %588 = vmatprep.subr.bf16.mxu0 0
    %589 = vmatpush1.bf16.msra.mxu0 0
    %590 = vmatprep.subr.bf16.mxu0 0
    %591 = vmatpush1.bf16.msra.mxu0 0
    %592 = vmatprep.subr.bf16.mxu0 0
    %593 = vmatpush1.bf16.msra.mxu0 0
    %594 = vmatprep.subr.bf16.mxu0 0
    %595 = vmatpush1.bf16.msra.mxu0 0
    %596 = vmatprep.mubr.bf16.mxu0 0
    %597 = vmatmul.mubr.bf16.gmra.mrb[0].mxu0 %v562
    %v598 = vpop.f32.mrb[0].mxu0
    %v599 = vadd.f32 0.0, %v598
    %v600 = vpop.f32.mrb[0].mxu0
    %v601 = vpop.f32.mrb[0].mxu0
    %v602 = vpop.f32.mrb[0].mxu0
    %603 = vdwg.mxu0
    %v604 = vunpack.c.l.bf16 %v557
    %v605 = vadd.f32 %v604, %v599
    %v606 = vxor.u32 %v605, 2147483648
    %v607 = vmul.f32 %v606, 1.442695
    %v608 = vpow.pop %v607
    %v609 = vadd.f32 %v608, 1.0
    %v610 = vrcp.pop %v609
    %v611 = vmul.f32 1.0, %v610
    %v612 = vtanh.pop %v605
    %v613 = vmul.f32 %v611, %v523
    %615 = vrot.lane.b32.xlu0 %v612, 32
    %v616 = vpop.permute.xlu0 %615
    %v618 = vmul.f32 %v611, %v616
    %620 = vrot.lane.b32.xlu0 %v618, 32
    %v621 = vpop.permute.xlu0 %620
    %v623 = vadd.f32 %v613, %v621
    %v624 = vtanh.pop %v623
    %626 = vrot.lane.b32.xlu0 %v624, 32
    %v627 = vpop.permute.xlu0 %626
    %v629 = vmul.f32 %v611, %v627
    %v632 = vunpack.c.l.s4 1966171168
    %v633 = vunpack.c.0.s8 %v632
    %v634 = vlaneseq
    %v635 = vshrl.u32 %v634, 7
    %v636 = vsub.s32 %v633, %v635
    %v637 = vrot.slane %v629, %v636
    %v638 = vcombine.high %v637, %v637
    %v639 = vlaneseq
    %v640 = vshrl.u32 %v639, 7
    %v641 = vsub.s32 0, %v640
    %v642 = vrot.slane %v637, %v641
    %v643 = vlaneseq
    %v644 = vshrl.u32 %v643, 7
    %v645 = vsub.s32 0, %v644
    %v646 = vrot.slane %v638, %v645
    %647 = vrot.lane.b32.xlu0 %v642, 64
    %v648 = vpop.permute.xlu0 %647
    %649 = vrot.lane.b32.xlu0 %v646, 64
    %v650 = vpop.permute.xlu0 %649
    %653 = vst.msk [vmem:[#allocation4 + $0x5] sm:$0x1] %vm152, %v648
    %654 = vst.msk [vmem:[#allocation4 + $0xd] sm:$0x1] %vm152, %v650
    %v655 = vpack.c.bf16 %v629, %v629
    %s656 = scalar_lea.vmem %s0, 6
    %v657 = vld [vmem:[%s656] sm:$0x1]
    %659 = vrot.lane.b32.xlu0 %v655, 64
    %v660 = vpop.permute.xlu0 %659
    %v662 = vsel %vm48, %v660, 0
    %664 = vmatprep.subr.bf16.mxu0 0
    %665 = vmatpush1.bf16.msra.mxu0 %v44
    %666 = vmatprep.subr.bf16.mxu0 0
    %667 = vmatpush1.bf16.msra.mxu0 %v45
    %668 = vmatprep.subr.bf16.mxu0 0
    %669 = vmatpush1.bf16.msra.mxu0 0
    %670 = vmatprep.subr.bf16.mxu0 0
    %671 = vmatpush1.bf16.msra.mxu0 0
    %672 = vmatprep.subr.bf16.mxu0 0
    %673 = vmatpush1.bf16.msra.mxu0 0
    %674 = vmatprep.subr.bf16.mxu0 0
    %675 = vmatpush1.bf16.msra.mxu0 0
    %676 = vmatprep.subr.bf16.mxu0 0
    %677 = vmatpush1.bf16.msra.mxu0 0
    %678 = vmatprep.subr.bf16.mxu0 0
    %679 = vmatpush1.bf16.msra.mxu0 0
    %680 = vmatprep.subr.bf16.mxu0 0
    %681 = vmatpush1.bf16.msra.mxu0 0
    %682 = vmatprep.subr.bf16.mxu0 0
    %683 = vmatpush1.bf16.msra.mxu0 0
    %684 = vmatprep.subr.bf16.mxu0 0
    %685 = vmatpush1.bf16.msra.mxu0 0
    %686 = vmatprep.subr.bf16.mxu0 0
    %687 = vmatpush1.bf16.msra.mxu0 0
    %688 = vmatprep.subr.bf16.mxu0 0
    %689 = vmatpush1.bf16.msra.mxu0 0
    %690 = vmatprep.subr.bf16.mxu0 0
    %691 = vmatpush1.bf16.msra.mxu0 0
    %692 = vmatprep.subr.bf16.mxu0 0
    %693 = vmatpush1.bf16.msra.mxu0 0
    %694 = vmatprep.subr.bf16.mxu0 0
    %695 = vmatpush1.bf16.msra.mxu0 0
    %696 = vmatprep.mubr.bf16.mxu0 0
    %697 = vmatmul.mubr.bf16.gmra.mrb[0].mxu0 %v662
    %v698 = vpop.f32.mrb[0].mxu0
    %v699 = vadd.f32 0.0, %v698
    %v700 = vpop.f32.mrb[0].mxu0
    %v701 = vpop.f32.mrb[0].mxu0
    %v702 = vpop.f32.mrb[0].mxu0
    %703 = vdwg.mxu0
    %v704 = vunpack.c.l.bf16 %v657
    %v705 = vadd.f32 %v704, %v699
    %v706 = vxor.u32 %v705, 2147483648
    %v707 = vmul.f32 %v706, 1.442695
    %v708 = vpow.pop %v707
    %v709 = vadd.f32 %v708, 1.0
    %v710 = vrcp.pop %v709
    %v711 = vmul.f32 1.0, %v710
    %v712 = vtanh.pop %v705
    %v713 = vmul.f32 %v711, %v623
    %715 = vrot.lane.b32.xlu0 %v712, 32
    %v716 = vpop.permute.xlu0 %715
    %v718 = vmul.f32 %v711, %v716
    %720 = vrot.lane.b32.xlu0 %v718, 32
    %v721 = vpop.permute.xlu0 %720
    %v723 = vadd.f32 %v713, %v721
    %v724 = vtanh.pop %v723
    %726 = vrot.lane.b32.xlu0 %v724, 32
    %v727 = vpop.permute.xlu0 %726
    %v729 = vmul.f32 %v711, %v727
    %v732 = vunpack.c.l.s4 1966171168
    %v733 = vunpack.c.0.s8 %v732
    %v734 = vlaneseq
    %v735 = vshrl.u32 %v734, 7
    %v736 = vsub.s32 %v733, %v735
    %v737 = vrot.slane %v729, %v736
    %v738 = vcombine.high %v737, %v737
    %v739 = vlaneseq
    %v740 = vshrl.u32 %v739, 7
    %v741 = vsub.s32 0, %v740
    %v742 = vrot.slane %v737, %v741
    %v743 = vlaneseq
    %v744 = vshrl.u32 %v743, 7
    %v745 = vsub.s32 0, %v744
    %v746 = vrot.slane %v738, %v745
    %747 = vrot.lane.b32.xlu0 %v742, 64
    %v748 = vpop.permute.xlu0 %747
    %749 = vrot.lane.b32.xlu0 %v746, 64
    %v750 = vpop.permute.xlu0 %749
    %753 = vst.msk [vmem:[#allocation4 + $0x6] sm:$0x1] %vm152, %v748
    %754 = vst.msk [vmem:[#allocation4 + $0xe] sm:$0x1] %vm152, %v750
    %v755 = vpack.c.bf16 %v729, %v729
    %s756 = scalar_lea.vmem %s0, 7
    %v757 = vld [vmem:[%s756] sm:$0x1]
    %759 = vrot.lane.b32.xlu0 %v755, 64
    %v760 = vpop.permute.xlu0 %759
    %v762 = vsel %vm48, %v760, 0
    %764 = vmatprep.subr.bf16.mxu0 0
    %765 = vmatpush1.bf16.msra.mxu0 %v44
    %766 = vmatprep.subr.bf16.mxu0 0
    %767 = vmatpush1.bf16.msra.mxu0 %v45
    %768 = vmatprep.subr.bf16.mxu0 0
    %769 = vmatpush1.bf16.msra.mxu0 0
    %770 = vmatprep.subr.bf16.mxu0 0
    %771 = vmatpush1.bf16.msra.mxu0 0
    %772 = vmatprep.subr.bf16.mxu0 0
    %773 = vmatpush1.bf16.msra.mxu0 0
    %774 = vmatprep.subr.bf16.mxu0 0
    %775 = vmatpush1.bf16.msra.mxu0 0
    %776 = vmatprep.subr.bf16.mxu0 0
    %777 = vmatpush1.bf16.msra.mxu0 0
    %778 = vmatprep.subr.bf16.mxu0 0
    %779 = vmatpush1.bf16.msra.mxu0 0
    %780 = vmatprep.subr.bf16.mxu0 0
    %781 = vmatpush1.bf16.msra.mxu0 0
    %782 = vmatprep.subr.bf16.mxu0 0
    %783 = vmatpush1.bf16.msra.mxu0 0
    %784 = vmatprep.subr.bf16.mxu0 0
    %785 = vmatpush1.bf16.msra.mxu0 0
    %786 = vmatprep.subr.bf16.mxu0 0
    %787 = vmatpush1.bf16.msra.mxu0 0
    %788 = vmatprep.subr.bf16.mxu0 0
    %789 = vmatpush1.bf16.msra.mxu0 0
    %790 = vmatprep.subr.bf16.mxu0 0
    %791 = vmatpush1.bf16.msra.mxu0 0
    %792 = vmatprep.subr.bf16.mxu0 0
    %793 = vmatpush1.bf16.msra.mxu0 0
    %794 = vmatprep.subr.bf16.mxu0 0
    %795 = vmatpush1.bf16.msra.mxu0 0
    %796 = vmatprep.mubr.bf16.mxu0 0
    %797 = vmatmul.mubr.bf16.gmra.mrb[0].mxu0 %v762
    %v798 = vpop.f32.mrb[0].mxu0
    %v799 = vadd.f32 0.0, %v798
    %v800 = vpop.f32.mrb[0].mxu0
    %v801 = vpop.f32.mrb[0].mxu0
    %v802 = vpop.f32.mrb[0].mxu0
    %803 = vdwg.mxu0
    %v804 = vunpack.c.l.bf16 %v757
    %v805 = vadd.f32 %v804, %v799
    %v806 = vxor.u32 %v805, 2147483648
    %v807 = vmul.f32 %v806, 1.442695
    %v808 = vpow.pop %v807
    %v809 = vadd.f32 %v808, 1.0
    %v810 = vrcp.pop %v809
    %v811 = vmul.f32 1.0, %v810
    %v812 = vtanh.pop %v805
    %v813 = vmul.f32 %v811, %v723
    %815 = vrot.lane.b32.xlu0 %v812, 32
    %v816 = vpop.permute.xlu0 %815
    %v818 = vmul.f32 %v811, %v816
    %820 = vrot.lane.b32.xlu0 %v818, 32
    %v821 = vpop.permute.xlu0 %820
    %v823 = vadd.f32 %v813, %v821
    %v824 = vtanh.pop %v823
    %826 = vrot.lane.b32.xlu0 %v824, 32
    %v827 = vpop.permute.xlu0 %826
    %v829 = vmul.f32 %v811, %v827
    %v832 = vunpack.c.l.s4 1966171168
    %v833 = vunpack.c.0.s8 %v832
    %v834 = vlaneseq
    %v835 = vshrl.u32 %v834, 7
    %v836 = vsub.s32 %v833, %v835
    %v837 = vrot.slane %v829, %v836
    %v838 = vcombine.high %v837, %v837
    %v839 = vlaneseq
    %v840 = vshrl.u32 %v839, 7
    %v841 = vsub.s32 0, %v840
    %v842 = vrot.slane %v837, %v841
    %v843 = vlaneseq
    %v844 = vshrl.u32 %v843, 7
    %v845 = vsub.s32 0, %v844
    %v846 = vrot.slane %v838, %v845
    %847 = vrot.lane.b32.xlu0 %v842, 64
    %v848 = vpop.permute.xlu0 %847
    %849 = vrot.lane.b32.xlu0 %v846, 64
    %v850 = vpop.permute.xlu0 %849
    %853 = vst.msk [vmem:[#allocation4 + $0x7] sm:$0x1] %vm152, %v848
    %854 = vst.msk [vmem:[#allocation4 + $0xf] sm:$0x1] %vm152, %v850
    %v855 = vpack.c.bf16 %v829, %v829
    %v858 = vunpack.c.l.s4 1966171168
    %v859 = vunpack.c.0.s8 %v858
    %v860 = vlaneseq
    %v861 = vshrl.u32 %v860, 7
    %v862 = vsub.s32 %v859, %v861
    %v863 = vrot.slane %v855, %v862
    %v865 = vunpack.c.l.s4 1966171168
    %v866 = vunpack.c.0.s8 %v865
    %v867 = vlaneseq
    %v868 = vshrl.u32 %v867, 7
    %v869 = vsub.s32 %v866, %v868
    %v870 = vrot.slane %v863, %v869
    %871 = vrot.lane.b32.xlu0 %v870, 64
    %v872 = vpop.permute.xlu0 %871
    %874 = vst.msk [vmem:[#allocation2] sm:$0x1] %vm152, %v872
    %v877 = vunpack.c.l.s4 1983009808
    %v878 = vunpack.c.0.s8 %v877
    %v879 = vlaneseq
    %v880 = vshrl.u32 %v879, 7
    %v881 = vsub.s32 %v878, %v880
    %v882 = vrot.slane %v823, %v881
    %883 = vrot.lane.b32.xlu0 %v882, 96
    %v884 = vpop.permute.xlu0 %883
    %vm886 = vcmask 254976
    %887 = vst.msk [vmem:[#allocation3] sm:$0x3] %vm886, %v884
    // Predicated region
    $region22: #{question_lstm_forward.1} parent=1 // pred_check
      _
    $region23: #{question_lstm_forward.1} parent=1 // pred_check_branch
      %889 = sbr.rel (0) target = $region25
    $region24: #{question_lstm_forward.1} parent=1 // pred_region
      %s891 = ssub.s32 256, 256
      %892 = vsyncadd [#allocation5], %s891
      %s893 = sshll.u32 [#allocation4], 4
      %s894 = int_to_ptr.vmem [resolvable:$true] %s893
      %899 = dma.vmem_to_hbm [thread:$0]  %s894, 256, %s4, [#allocation5], 128, 128, 8
    $region25: #{question_lstm_forward.1} parent=1 // pred_fallthru
      _
    // Predicated region
    $region26: #{question_lstm_forward.1} parent=1 // pred_check
      _
    $region27: #{question_lstm_forward.1} parent=1 // pred_check_branch
      %901 = sbr.rel (0) target = $region29
    $region28: #{question_lstm_forward.1} parent=1 // pred_region
      %902 = dma.done [#allocation5], 256
    $region29: #{question_lstm_forward.1} parent=1 // pred_fallthru
      _
    %903 = vsyncpa [#allocation5], 1

</llo_original>
